<compile_context>
chip_gen: v5e
topology: v5e:2x2
jax: 0.10.0
libtpu: 0.0.40
codegen_flags: <defaults>
</compile_context>

<pallas_src>
import functools

import jax
import jax.numpy as jnp
from jax.experimental import pallas as pl
from jax.experimental.pallas import tpu as pltpu


def _rup(x, m):
    return ((x + m - 1) // m) * m


# ----------------------------------------------------------------------------
# GEMM kernels: bf16 operands, fp32 accumulation, fused bias (+sigmoid) and
# optional BN partial statistics (per-column sum / sum-sq of the PRE-bias
# accumulator, so zero-padded rows contribute nothing and no masking /
# program_id is needed).
# ----------------------------------------------------------------------------
def _gemm_epilogue(y32, b_ref, o_ref, st_ref, act):
    out = y32 + b_ref[...]
    if act == "sigmoid":
        out = jax.nn.sigmoid(out)
    o_ref[...] = out.astype(o_ref.dtype)
    if st_ref is not None:
        s0 = jnp.sum(y32, axis=0, keepdims=True)          # (1, tn)
        s1 = jnp.sum(y32 * y32, axis=0, keepdims=True)    # (1, tn)
        ridx = jax.lax.broadcasted_iota(jnp.int32, st_ref.shape, 0)
        st_ref[...] = jnp.where(ridx == 0, s0, jnp.where(ridx == 1, s1, 0.0))


def _gemm_kernel_single(a_ref, w_ref, b_ref, *refs, stats, act):
    # Single k-step: no accumulator scratch, no conditionals.
    if stats:
        o_ref, st_ref = refs
    else:
        (o_ref,) = refs
        st_ref = None
    y = jnp.dot(a_ref[...], w_ref[...], preferred_element_type=jnp.float32)
    _gemm_epilogue(y, b_ref, o_ref, st_ref, act)


def _gemm_kernel_multi(a_ref, w_ref, b_ref, *refs, nk, stats, act):
    if stats:
        o_ref, st_ref, acc_ref = refs
    else:
        o_ref, acc_ref = refs
        st_ref = None
    k = pl.program_id(2)            # top-level only (never inside pl.when)

    @pl.when(k == 0)
    def _init():
        acc_ref[...] = jnp.zeros_like(acc_ref)

    acc_ref[...] += jnp.dot(a_ref[...], w_ref[...],
                            preferred_element_type=jnp.float32)

    @pl.when(k == nk - 1)
    def _fin():
        _gemm_epilogue(acc_ref[...], b_ref, o_ref, st_ref, act)


def _gemm_tiles(M, K, N):
    tm = min(128, _rup(M, 16))
    if K <= 128:
        tk = K                               # full-dim block: no zero-K padding
    else:
        tk = min(_rup(K, 128), 4096)         # full K panel resident when possible
    Nr = _rup(N, 128)
    tn = min(512 if M <= 32 else 256, Nr)
    return tm, tk, tn


def _gemm(a, w, b, *, stats, act, out_dtype):
    M, K = a.shape
    N = w.shape[1]
    tm, tk, tn = _gemm_tiles(M, K, N)
    Mp, Kp, Np = _rup(M, tm), _rup(K, tk), _rup(N, tn)
    gi, gj, gk = Mp // tm, Np // tn, Kp // tk

    a_p = jnp.pad(a.astype(jnp.bfloat16), ((0, Mp - M), (0, Kp - K)))
    w_p = jnp.pad(w.astype(jnp.bfloat16), ((0, Kp - K), (0, Np - N)))
    b_p = jnp.pad(b.astype(jnp.float32).reshape(1, N), ((0, 0), (0, Np - N)))

    in_specs = [
        pl.BlockSpec((tm, tk), lambda i, j, k: (i, k)),
        pl.BlockSpec((tk, tn), lambda i, j, k: (k, j)),
        pl.BlockSpec((1, tn), lambda i, j, k: (0, j)),
    ]
    out_shape = [jax.ShapeDtypeStruct((Mp, Np), out_dtype)]
    out_specs = [pl.BlockSpec((tm, tn), lambda i, j, k: (i, j))]
    if stats:
        out_shape.append(jax.ShapeDtypeStruct((gi * 8, Np), jnp.float32))
        out_specs.append(pl.BlockSpec((8, tn), lambda i, j, k: (i, j)))

    if gk == 1:
        kernel = functools.partial(_gemm_kernel_single, stats=stats, act=act)
        scratch = []
    else:
        kernel = functools.partial(_gemm_kernel_multi, nk=gk, stats=stats, act=act)
        scratch = [pltpu.VMEM((tm, tn), jnp.float32)]

    outs = pl.pallas_call(
        kernel,
        out_shape=tuple(out_shape),
        grid=(gi, gj, gk),
        in_specs=in_specs,
        out_specs=tuple(out_specs),
        scratch_shapes=scratch,
        compiler_params=pltpu.CompilerParams(
            dimension_semantics=("parallel", "parallel", "arbitrary")),
    )(a_p, w_p, b_p)

    if stats:
        y, st = outs
        s0 = jnp.sum(st[0::8, :N], axis=0)
        s1 = jnp.sum(st[1::8, :N], axis=0)
        return y, s0, s1
    return outs[0]


def gemm_bias_stats(a, w, b):
    """Padded bf16 (Mp,Np) result of a@w+b plus batch mean/var per column."""
    M = a.shape[0]
    y_pad, s0, s1 = _gemm(a, w, b, stats=True, act=None, out_dtype=jnp.bfloat16)
    mean = s0 / M + b.astype(jnp.float32)          # stats were pre-bias
    var = jnp.maximum(s1 / M - (s0 / M) ** 2, 0.0)  # variance is bias-invariant
    return y_pad, mean, var


def gemm_bias_act(a, w, b, act=None, out_dtype=jnp.bfloat16):
    """Padded (Mp,Np) result of act(a@w+b); act in {None,'sigmoid'} fused."""
    return _gemm(a, w, b, stats=False, act=act, out_dtype=out_dtype)


# ----------------------------------------------------------------------------
# Fused per-channel affine (BatchNorm) + LeakyReLU(0.01), row-tiled.
# ----------------------------------------------------------------------------
def _affine_act_kernel(x_ref, s_ref, t_ref, o_ref):
    y = x_ref[...].astype(jnp.float32) * s_ref[...] + t_ref[...]
    o_ref[...] = jnp.where(y >= 0, y, 0.01 * y).astype(o_ref.dtype)


def affine_leaky_relu(x, scale, shift, out_dtype=jnp.bfloat16):
    """y = leaky_relu(x * scale + shift); x:(M,N) (bf16 ok), scale/shift:(N,)."""
    M, N = x.shape
    Np = _rup(N, 128)
    bm = min(512, _rup(M, 8))
    Mp = _rup(M, bm)
    x_p = jnp.pad(x, ((0, Mp - M), (0, Np - N)))
    s_p = jnp.pad(scale.astype(jnp.float32).reshape(1, N), ((0, 0), (0, Np - N)))
    t_p = jnp.pad(shift.astype(jnp.float32).reshape(1, N), ((0, 0), (0, Np - N)))
    out = pl.pallas_call(
        _affine_act_kernel,
        out_shape=jax.ShapeDtypeStruct((Mp, Np), out_dtype),
        grid=(Mp // bm,),
        in_specs=[
            pl.BlockSpec((bm, Np), lambda i: (i, 0)),
            pl.BlockSpec((1, Np), lambda i: (0, 0)),
            pl.BlockSpec((1, Np), lambda i: (0, 0)),
        ],
        out_specs=pl.BlockSpec((bm, Np), lambda i: (i, 0)),
        compiler_params=pltpu.CompilerParams(dimension_semantics=("parallel",)),
    )(x_p, s_p, t_p)
    return out[:M, :N]


# ----------------------------------------------------------------------------
# Glue: im2col (NHWC) and layer wrappers.
# ----------------------------------------------------------------------------
def _im2col_nhwc(x, k, stride, padding):
    """x: (N,H,W,C) -> (N*Ho*Wo, k*k*C) with K-order (ky, kx, c)."""
    Nb, H, W, C = x.shape
    Ho = (H + 2 * padding - k) // stride + 1
    Wo = (W + 2 * padding - k) // stride + 1
    xp = jnp.pad(x, ((0, 0), (padding, padding), (padding, padding), (0, 0)))
    cols = []
    for ky in range(k):
        for kx in range(k):
            cols.append(xp[:, ky:ky + stride * Ho:stride,
                           kx:kx + stride * Wo:stride, :])
    patches = jnp.stack(cols, axis=3)                # (N, Ho, Wo, k*k, C)
    return patches.reshape(Nb * Ho * Wo, k * k * C), (Nb, Ho, Wo)


def encoder_layer(h, w, b, gamma, beta):
    """Conv2d(k4,s2,p1) + BatchNorm(train) + LeakyReLU(0.01).  NHWC bf16 in/out."""
    cout, cin = w.shape[0], w.shape[1]
    a, (Nb, Ho, Wo) = _im2col_nhwc(h, 4, 2, 1)
    wm = w.transpose(2, 3, 1, 0).reshape(16 * cin, cout)     # K-order (ky,kx,ci)
    y_pad, mean, var = gemm_bias_stats(a, wm, b)             # stats from fp32 acc
    scale = gamma * jax.lax.rsqrt(var + 1e-5)
    shift = beta - mean * scale
    Np = y_pad.shape[1]
    scale_p = jnp.pad(scale, (0, Np - cout))
    shift_p = jnp.pad(shift, (0, Np - cout))
    out = affine_leaky_relu(y_pad, scale_p, shift_p)         # padded in, padded out
    M = a.shape[0]
    return out[:M, :cout].reshape(Nb, Ho, Wo, cout)          # single crop


def conv_transpose_gemm(h, w_t, b, act=None, out_dtype=jnp.bfloat16):
    """ConvTranspose2d(k4,s2,p1) via sub-pixel phase decomposition.

    h: (N,H,W,Cin) -> (N,2H,2W,Cout).  One GEMM with K=4*Cin, N=4*Cout
    (a 2x2 sub-kernel per output parity); no zero-insertion.
    """
    Nb, H, W, cin = h.shape
    cout = w_t.shape[1]
    xp = jnp.pad(h, ((0, 0), (1, 1), (1, 1), (0, 0)))        # (N,H+2,W+2,Cin)
    cols = [xp[:, dy:dy + H + 1, dx:dx + W + 1, :]
            for dy in range(2) for dx in range(2)]
    patches = jnp.stack(cols, axis=3)                        # (N,H+1,W+1,4,Cin)
    a = patches.reshape(Nb * (H + 1) * (W + 1), 4 * cin)     # K-order (dy,dx,ci)

    # Phase (py,px) sub-kernel: tap dy maps to kernel row ky = (3-py) - 2*dy.
    wcols = []
    for py in (0, 1):
        for px in (0, 1):
            sub = w_t[:, :, 3 - py::-2, 3 - px::-2]          # (Cin,Cout,2,2)
            wcols.append(sub.transpose(2, 3, 0, 1).reshape(4 * cin, cout))
    wm = jnp.concatenate(wcols, axis=1)                      # (4*Cin, 4*Cout)
    b4 = jnp.concatenate([b, b, b, b])

    M, N4 = a.shape[0], 4 * cout
    y = gemm_bias_act(a, wm, b4, act=act, out_dtype=out_dtype)[:M, :N4]
    y4 = y.reshape(Nb, H + 1, W + 1, 4, cout)
    p00 = y4[:, 0:H, 0:W, 0, :]
    p01 = y4[:, 0:H, 1:W + 1, 1, :]
    p10 = y4[:, 1:H + 1, 0:W, 2, :]
    p11 = y4[:, 1:H + 1, 1:W + 1, 3, :]
    row0 = jnp.stack([p00, p01], axis=3)                     # (N,H,W,2,C)
    row1 = jnp.stack([p10, p11], axis=3)
    full = jnp.stack([row0, row1], axis=2)                   # (N,H,2,W,2,C)
    return full.reshape(Nb, 2 * H, 2 * W, cout)


def decoder_layer(h, w_t, b, gamma, beta):
    """ConvTranspose2d(k4,s2,p1) + BatchNorm(train) + LeakyReLU(0.01)."""
    y = conv_transpose_gemm(h, w_t, b)                       # (N,2H,2W,C) bf16
    Nb, Ho, Wo, cout = y.shape
    ym = y.reshape(Nb * Ho * Wo, cout)
    mean = jnp.mean(ym, axis=0, dtype=jnp.float32)
    msq = jnp.mean(jnp.square(ym.astype(jnp.float32)), axis=0)
    var = jnp.maximum(msq - mean * mean, 0.0)
    scale = gamma * jax.lax.rsqrt(var + 1e-5)
    shift = beta - mean * scale
    out = affine_leaky_relu(ym, scale, shift)
    return out.reshape(Nb, Ho, Wo, cout)


def decoder_final(h, w_t, b):
    """Last layer: ConvTranspose2d + Sigmoid (sigmoid fused in GEMM epilogue)."""
    return conv_transpose_gemm(h, w_t, b, act="sigmoid", out_dtype=jnp.float32)


# ----------------------------------------------------------------------------
# Reference (for the phase-decomposition value check only).
# ----------------------------------------------------------------------------
def _conv_transpose_ref(h_nhwc, w_t, b):
    x = h_nhwc.astype(jnp.float32).transpose(0, 3, 1, 2)               # NCHW
    w_conv = jnp.flip(w_t, axis=(2, 3)).transpose(1, 0, 2, 3).astype(jnp.float32)
    y = jax.lax.conv_general_dilated(
        x, w_conv, window_strides=(1, 1), padding=((2, 2), (2, 2)),
        lhs_dilation=(2, 2), rhs_dilation=(1, 1),
        dimension_numbers=("NCHW", "OIHW", "NCHW"),
        precision=jax.lax.Precision.HIGHEST)
    return (y + b.reshape(1, -1, 1, 1)).transpose(0, 2, 3, 1)           # NHWC


# ----------------------------------------------------------------------------
# Model: parameters + forward (matches the PyTorch ConvAutoencoder spec)
# ----------------------------------------------------------------------------
ENC = [(3, 64), (64, 128), (128, 256), (256, 512), (512, 512)]
DEC = [(512, 512), (512, 256), (256, 128), (128, 64), (64, 3)]


def init_params(key):
    params = {"enc": [], "dec": []}
    for (cin, cout) in ENC:
        key, k1, k2 = jax.random.split(key, 3)
        w = jax.random.normal(k1, (cout, cin, 4, 4), jnp.float32) * 0.05
        b = jax.random.normal(k2, (cout,), jnp.float32) * 0.02
        params["enc"].append((w, b, jnp.ones((cout,), jnp.float32),
                              jnp.zeros((cout,), jnp.float32)))
    for (cin, cout) in DEC:
        key, k1, k2 = jax.random.split(key, 3)
        w = jax.random.normal(k1, (cin, cout, 4, 4), jnp.float32) * 0.05
        b = jax.random.normal(k2, (cout,), jnp.float32) * 0.02
        params["dec"].append((w, b, jnp.ones((cout,), jnp.float32),
                              jnp.zeros((cout,), jnp.float32)))
    return params


def conv_autoencoder_forward(x, params):
    """x: (N,3,H,W) float32 NCHW -> (N,3,H,W) float32 NCHW (sigmoid output)."""
    h = x.transpose(0, 2, 3, 1).astype(jnp.bfloat16)          # NHWC bf16 internally
    for (w, b, gamma, beta) in params["enc"]:
        h = encoder_layer(h, w, b, gamma, beta)
    n_dec = len(params["dec"])
    for i, (w, b, gamma, beta) in enumerate(params["dec"]):
        if i < n_dec - 1:
            h = decoder_layer(h, w, b, gamma, beta)
        else:
            h = decoder_final(h, w, b)
    return h.transpose(0, 3, 1, 2).astype(jnp.float32)


if __name__ == "__main__":
    key = jax.random.PRNGKey(0)
    k_in, k_par, k_chk = jax.random.split(key, 3)

    # Value-check the phase-decomposed ConvTranspose against lax (review concern).
    kc1, kc2, kc3 = jax.random.split(k_chk, 3)
    ht = (jax.random.normal(kc1, (1, 4, 4, 8), jnp.float32) * 0.5).astype(jnp.bfloat16)
    wt = (jax.random.normal(kc2, (8, 8, 4, 4), jnp.float32) * 0.1
          ).astype(jnp.bfloat16).astype(jnp.float32)
    bt = jax.random.normal(kc3, (8,), jnp.float32) * 0.05
    got = conv_transpose_gemm(ht, wt, bt, act=None, out_dtype=jnp.float32)
    want = _conv_transpose_ref(ht.astype(jnp.float32), wt, bt)
    err = float(jnp.max(jnp.abs(got - want)))
    assert err < 1e-2, f"conv_transpose phase decomposition mismatch: {err}"

    # 5 stride-2 encoder stages need H = W = 32 minimum; input channels = 3.
    x = jax.random.uniform(k_in, (2, 3, 32, 32), jnp.float32)   # NCHW
    params = init_params(k_par)

    fwd = jax.jit(conv_autoencoder_forward)
    out = jax.block_until_ready(fwd(x, params))

    assert out.shape == (2, 3, 32, 32), out.shape
    assert bool(jnp.all(jnp.isfinite(out)))
    assert bool(jnp.all((out >= 0.0) & (out <= 1.0)))   # sigmoid output range
    print("KERNEL_OK")
</pallas_src>

<mosaic_0001>
module attributes {stable_mosaic.version = 11 : i64} {
  func.func @_gemm_kernel_single(%arg0: i32, %arg1: i32, %arg2: i32, %arg3: memref<32x32xbf16, #tpu.memory_space<vmem>>, %arg4: memref<32x128xbf16, #tpu.memory_space<vmem>>, %arg5: memref<1x128xf32, #tpu.memory_space<vmem>>, %arg6: memref<32x128xf32, #tpu.memory_space<vmem>>) attributes {dimension_semantics = [#tpu.dimension_semantics<parallel>, #tpu.dimension_semantics<parallel>, #tpu.dimension_semantics<arbitrary>], iteration_bounds = array<i64: 1, 1, 1>, scalar_prefetch = 0 : i64, scratch_operands = 0 : i64, tpu.core_type = #tpu.core_type<tc>, window_params = [{transform_indices = @transform_0, window_bounds = array<i64: 32, 32>}, {transform_indices = @transform_1, window_bounds = array<i64: 32, 128>}, {transform_indices = @transform_2, window_bounds = array<i64: 1, 128>}, {transform_indices = @transform_3, window_bounds = array<i64: 32, 128>}]} {
    %c0 = arith.constant 0 : index
    %c0_0 = arith.constant 0 : index
    %0 = vector.load %arg3[%c0, %c0_0] : memref<32x32xbf16, #tpu.memory_space<vmem>>, vector<32x32xbf16>
    %c0_1 = arith.constant 0 : index
    %c0_2 = arith.constant 0 : index
    %1 = vector.load %arg4[%c0_1, %c0_2] : memref<32x128xbf16, #tpu.memory_space<vmem>>, vector<32x128xbf16>
    %cst = arith.constant dense<0.000000e+00> : vector<32x128xf32>
    %2 = tpu.matmul %0, %1, %cst {dimension_numbers = #tpu.dot_dimension_numbers<[1], [0], [0], [1], [0, 0, 1, 1], [], []>} : vector<32x32xbf16>, vector<32x128xbf16>, vector<32x128xf32> -> vector<32x128xf32>
    %c0_3 = arith.constant 0 : index
    %c0_4 = arith.constant 0 : index
    %3 = vector.load %arg5[%c0_3, %c0_4] : memref<1x128xf32, #tpu.memory_space<vmem>>, vector<1x128xf32>
    %4 = vector.broadcast %3 : vector<1x128xf32> to vector<32x128xf32>
    %5 = arith.addf %2, %4 : vector<32x128xf32>
    %c0_5 = arith.constant 0 : index
    %c0_6 = arith.constant 0 : index
    %6 = vector.load %arg6[%c0_5, %c0_6] : memref<32x128xf32, #tpu.memory_space<vmem>>, vector<32x128xf32>
    tpu.vector_store %arg6[%c0_5, %c0_6], %5 {strides = array<i32>} : memref<32x128xf32, #tpu.memory_space<vmem>>, vector<32x128xf32>,
    return
  }
  func.func @transform_0(%arg0: i32, %arg1: i32, %arg2: i32) -> (i32, i32) {
    %c0_i32 = arith.constant 0 : i32
    return %arg0, %arg2 : i32, i32
  }
  func.func @transform_1(%arg0: i32, %arg1: i32, %arg2: i32) -> (i32, i32) {
    %c0_i32 = arith.constant 0 : i32
    return %arg2, %arg1 : i32, i32
  }
  func.func @transform_2(%arg0: i32, %arg1: i32, %arg2: i32) -> (i32, i32) {
    %c0_i32 = arith.constant 0 : i32
    %c0_i32_0 = arith.constant 0 : i32
    return %c0_i32, %arg1 : i32, i32
  }
  func.func @transform_3(%arg0: i32, %arg1: i32, %arg2: i32) -> (i32, i32) {
    %c0_i32 = arith.constant 0 : i32
    return %arg0, %arg1 : i32, i32
  }
}

</mosaic_0001>

<llo_original>
// kernel: tpu_custom_call.1
$region0: #{tpu_custom_call.1}
  #allocation0 [shape = 'u32[]', space=smem, size = 0x4, offset = 0x4, fixed_abs, tag = 'smem constant byte address 0x4 - core index']
  #allocation1 [shape = 'u32[72,128]{1,0:T(1,128)}', space=vmem, size = 0x9000, scoped, tag = 'internal scratch']
  %s0 = inlined_call_operand.hbm [shape: bf16[32,32], index: 0, kind: input, shape index: {}]
  %s1 = inlined_call_operand.hbm [shape: bf16[32,128], index: 1, kind: input, shape index: {}]
  %s2 = inlined_call_operand.vmem [shape: f32[1,128], index: 2, kind: input, shape index: {}]
  %s3 = inlined_call_operand.hbm [shape: f32[32,128], index: 3, kind: output, shape index: {}]
  %s4 = sld [smem:[#allocation0]]
  $region30: #{tpu_custom_call.1} parent=0
    _
  %s6 = ssub.s32 1, %s4
  %s7 = scalar_select 0, %s6, %s4
  $region1: #{tpu_custom_call.1} parent=0
    #allocation2 [shape = 'u8[8192]{0}', space=vmem, size = 0x2000, scoped, tag = 'input window, operand 0, single buffered']
    #allocation3 [shape = 's32[1]{0}', space=sflag, size = 0x4, scoped, tag = 'scoped memory for tpu_custom_call.1']
    #allocation4 [shape = 's32[1]{0}', space=sflag, size = 0x4, scoped, tag = 'scoped memory for tpu_custom_call.1']
    #allocation5 [shape = 'u8[8192]{0}', space=vmem, size = 0x2000, scoped, tag = 'input window, operand 1, single buffered']
    #allocation6 [shape = 's32[1]{0}', space=sflag, size = 0x4, scoped, tag = 'scoped memory for tpu_custom_call.1']
    #allocation7 [shape = 'u8[16384]{0}', space=vmem, size = 0x4000, scoped, tag = 'output window, operand 0, single buffered']
    %8 = vsyncpa [#allocation3], 0
    %9 = vsyncpa [#allocation6], 0
    %10 = vsyncpa [#allocation4], 0
    // Predicated region
    $region2: #{tpu_custom_call.1} parent=1 // pred_check
      _
    $region3: #{tpu_custom_call.1} parent=1 // pred_check_branch
      %12 = sbr.rel (0) target = $region5
    $region4: #{tpu_custom_call.1} parent=1 // pred_region
      %14 = vsyncadd [#allocation3], 0
      %s15 = sshll.u32 %s0, 4
      %s16 = int_to_ptr.hbm [resolvable:$true] %s15
      %s17 = sshll.u32 [#allocation2], 4
      %s18 = int_to_ptr.vmem [resolvable:$true] %s17
      %23 = dma.hbm_to_vmem [thread:$0]  %s16, 256, %s18, [#allocation3], 64, 64, 4
    $region5: #{tpu_custom_call.1} parent=1 // pred_fallthru
      _
    // Predicated region
    $region6: #{tpu_custom_call.1} parent=1 // pred_check
      _
    $region7: #{tpu_custom_call.1} parent=1 // pred_check_branch
      %25 = sbr.rel (0) target = $region9
    $region8: #{tpu_custom_call.1} parent=1 // pred_region
      %27 = vsyncadd [#allocation6], 0
      %s28 = sshll.u32 %s1, 4
      %s29 = int_to_ptr.hbm [resolvable:$true] %s28
      %s30 = sshll.u32 [#allocation5], 4
      %s31 = int_to_ptr.vmem [resolvable:$true] %s30
      %36 = dma.hbm_to_vmem [thread:$0]  %s29, 256, %s31, [#allocation6], 64, 64, 4
    $region9: #{tpu_custom_call.1} parent=1 // pred_fallthru
      _
    // Predicated region
    $region10: #{tpu_custom_call.1} parent=1 // pred_check
      _
    $region11: #{tpu_custom_call.1} parent=1 // pred_check_branch
      %38 = sbr.rel (0) target = $region13
    $region12: #{tpu_custom_call.1} parent=1 // pred_region
      _
    $region13: #{tpu_custom_call.1} parent=1 // pred_fallthru
      _
    // Predicated region
    $region14: #{tpu_custom_call.1} parent=1 // pred_check
      _
    $region15: #{tpu_custom_call.1} parent=1 // pred_check_branch
      %40 = sbr.rel (0) target = $region17
    $region16: #{tpu_custom_call.1} parent=1 // pred_region
      %42 = dma.done [#allocation3], 256
    $region17: #{tpu_custom_call.1} parent=1 // pred_fallthru
      _
    // Predicated region
    $region18: #{tpu_custom_call.1} parent=1 // pred_check
      _
    $region19: #{tpu_custom_call.1} parent=1 // pred_check_branch
      %44 = sbr.rel (0) target = $region21
    $region20: #{tpu_custom_call.1} parent=1 // pred_region
      %46 = dma.done [#allocation6], 256
    $region21: #{tpu_custom_call.1} parent=1 // pred_fallthru
      _
    %v48 = vld [vmem:[#allocation2] sm:$0xf]
    %v49 = vld [vmem:[#allocation2 + $0x4] sm:$0xf]
    %v50 = vld [vmem:[#allocation2 + $0x8] sm:$0xf]
    %v51 = vld [vmem:[#allocation2 + $0xc] sm:$0xf]
    %v52 = vld [vmem:[#allocation5] sm:$0xf]
    %v53 = vld [vmem:[#allocation5 + $0x4] sm:$0xf]
    %v54 = vld [vmem:[#allocation5 + $0x8] sm:$0xf]
    %v55 = vld [vmem:[#allocation5 + $0xc] sm:$0xf]
    %v56 = vld [vmem:[%s2] sm:$0x1]
    %v58 = vperm.slane %v56, 0
    %v64 = vunpack.c.l.b16 %v48
    %v65 = vunpack.c.l.b16 %v49
    %v66 = vunpack.c.l.b16 %v50
    %v67 = vunpack.c.l.b16 %v51
    %v68 = vpack.c.b16 %v65, %v64
    %v69 = vpack.c.b16 %v67, %v66
    %v74 = vunpack.c.l.b16 %v52
    %v75 = vunpack.c.l.b16 %v53
    %v76 = vunpack.c.l.b16 %v54
    %v77 = vunpack.c.l.b16 %v55
    %v78 = vpack.c.b16 %v75, %v74
    %v79 = vpack.c.b16 %v77, %v76
    %vm82 = vcmask 261120
    %v84 = vsel %vm82, %v68, 0
    %v87 = vsel %vm82, %v69, 0
    %89 = vmatpush.bf16.msra.mxu0 0
    %90 = vmatpush.bf16.msra.mxu0 0
    %91 = vmatpush.bf16.msra.mxu0 0
    %92 = vmatpush.bf16.msra.mxu0 0
    %93 = vmatpush.bf16.msra.mxu0 0
    %94 = vmatpush.bf16.msra.mxu0 0
    %95 = vmatpush.bf16.msra.mxu0 %v79
    %96 = vmatpush.bf16.msra.mxu0 %v78
    %97 = vmatmul.bf16.gmra.mxu0 %v84
    %v98 = vpop.f32.mrf.mxu0
    %v99 = vadd.f32 %v58, %v98
    %v100 = vpop.f32.mrf.mxu0
    %v101 = vadd.f32 %v58, %v100
    %102 = vmatmul.bf16.gmra.mxu0 %v87
    %v103 = vpop.f32.mrf.mxu0
    %v104 = vadd.f32 %v58, %v103
    %v105 = vpop.f32.mrf.mxu0
    %v106 = vadd.f32 %v58, %v105
    %107 = vdwg.mxu0
    %108 = vst [vmem:[#allocation7] sm:$0xff] %v99
    %109 = vst [vmem:[#allocation7 + $0x8] sm:$0xff] %v101
    %110 = vst [vmem:[#allocation7 + $0x10] sm:$0xff] %v104
    %111 = vst [vmem:[#allocation7 + $0x18] sm:$0xff] %v106
    // Predicated region
    $region22: #{tpu_custom_call.1} parent=1 // pred_check
      _
    $region23: #{tpu_custom_call.1} parent=1 // pred_check_branch
      %113 = sbr.rel (0) target = $region25
    $region24: #{tpu_custom_call.1} parent=1 // pred_region
      %115 = vsyncadd [#allocation4], 0
      %s116 = sshll.u32 [#allocation7], 4
      %s117 = int_to_ptr.vmem [resolvable:$true] %s116
      %s118 = sshll.u32 %s3, 4
      %s119 = int_to_ptr.hbm [resolvable:$true] %s118
      %124 = dma.vmem_to_hbm [thread:$0]  %s117, 512, %s119, [#allocation4], 128, 128, 8
    $region25: #{tpu_custom_call.1} parent=1 // pred_fallthru
      _
    // Predicated region
    $region26: #{tpu_custom_call.1} parent=1 // pred_check
      _
    $region27: #{tpu_custom_call.1} parent=1 // pred_check_branch
      %126 = sbr.rel (0) target = $region29
    $region28: #{tpu_custom_call.1} parent=1 // pred_region
      %128 = dma.done [#allocation4], 512
    $region29: #{tpu_custom_call.1} parent=1 // pred_fallthru
      _
    %129 = vsyncpa [#allocation3], 1
    %130 = vsyncpa [#allocation6], 1
    %131 = vsyncpa [#allocation4], 1

</llo_original>
